<compile_context>
chip_gen: v6e
topology: v6e:2x2x1
jax: 0.10.0
libtpu: 0.0.40
codegen_flags: <defaults>
</compile_context>

<pallas_src>
import math
import functools

import jax
import jax.numpy as jnp
from jax.experimental import pallas as pl
from jax.experimental.pallas import tpu as pltpu


# ----------------------------- Kernel A: per-node projections ----------------------------
def _proj_kernel(T, F_out, h_ref, noh_ref, wkvq_ref, alpha_ref, kv_ref, qa_ref):
    """Per-node K/V/Q via a single type-masked-LHS matmul + exact per-type alpha select.

    Outputs:
      kv_ref: (tp, 2*F_out) bf16  [K | V]                      (gather source for Kernel B)
      qa_ref: (tp, 2*F_out) f32   [Q | sigmoid(skip) over d_k] (destination rows)
    """
    f32 = jnp.float32
    bf16 = jnp.bfloat16
    h = h_ref[...]                                                    # (tp, F_in) f32
    noh = noh_ref[...]                                                # (tp, T) f32 one-hot
    # masked LHS: column block t holds h for nodes of type t, zeros otherwise.
    hx = jnp.concatenate([h * noh[:, t:t + 1] for t in range(T)], axis=1).astype(bf16)
    kvq = jnp.dot(hx, wkvq_ref[...], preferred_element_type=f32)      # (tp, 3*F_out)

    al = alpha_ref[...]                                               # (T, F_out) sigmoid(skip)
    alpha = noh[:, 0:1] * al[0:1, :]
    for t in range(1, T):                                             # tiny exact f32 select
        alpha = alpha + noh[:, t:t + 1] * al[t:t + 1, :]

    kv_ref[...] = kvq[:, :2 * F_out].astype(kv_ref.dtype)
    qa_ref[...] = jnp.concatenate([kvq[:, 2 * F_out:], alpha], axis=1)


# --------------------- Kernel B: attention + aggregation + update ------------------------
def _attn_kernel(ta, DEG, F_out, R, T, H,
                 kv_ref,     # (ta*DEG, 2*F_out) bf16  gathered source [K|V] per edge (streamed)
                 qa_ref,     # (ta, 2*F_out) f32       destination [Q | alpha]
                 et_ref,     # (ta*DEG, 1) int32       per-edge relation id
                 noh_ref,    # (ta, T) f32             destination node-type one-hot
                 wrel_ref,   # (R*2*F_out, 2*F_out) bf16  stacked [[att*pri/sqrt_dk,0],[0,msg]]
                 aw_ref,     # (T*F_out, F_out) bf16      stacked a_weight
                 hsum_ref,   # (F_out, H) bf16            head-sum indicator
                 hexp_ref,   # (H, F_out) bf16            head-expand indicator
                 out_ref):   # (ta, F_out) f32
    f32 = jnp.float32
    bf16 = jnp.bfloat16
    taD = ta * DEG

    kv_e = kv_ref[...]                                                # (taD, 2*F_out) bf16
    rel = et_ref[...]                                                 # (taD, 1) int32

    # relation-masked LHS: block r holds [K|V] of edges with relation r (exact 0/1 mask).
    # One matmul (contraction R*2*F_out) replaces the R-wide kvproj + select pass.
    kv_masked = jnp.concatenate(
        [kv_e * (rel == r).astype(bf16) for r in range(R)], axis=1)   # (taD, R*2*F_out)
    kpvp = jnp.dot(kv_masked, wrel_ref[...], preferred_element_type=f32)   # (taD, 2*F_out)
    kp = kpvp[:, :F_out]       # already scaled by relation_pri / sqrt_dk
    vp = kpvp[:, F_out:]

    qa = qa_ref[...]
    q = qa[:, :F_out]                                                 # (ta, F_out) dst query
    alpha = qa[:, F_out:]                                             # (ta, F_out) skip gate

    # per-edge per-head attention logit: dot(kp, q_dst) within each head.
    prod = (kp.reshape(ta, DEG, F_out) * q[:, None, :]).reshape(taD, F_out)
    attn = jnp.dot(prod.astype(bf16), hsum_ref[...], preferred_element_type=f32)  # (taD, H)

    # softmax over the DEG incoming edges of each destination node (per head).
    a3 = attn.reshape(ta, DEG, H)
    amax = jnp.max(a3, axis=1, keepdims=True)
    ae = jnp.exp(a3 - amax)
    asm = ae * pl.reciprocal(jnp.sum(ae, axis=1, keepdims=True), approx=True)

    # weighted message sum.
    aw = jnp.dot(asm.reshape(taD, H).astype(bf16), hexp_ref[...],
                 preferred_element_type=f32)                          # (taD, F_out)
    t_feat = jnp.sum((aw * vp).reshape(ta, DEG, F_out), axis=1)       # (ta, F_out)

    # output projection (a_weight per dst type, masked-LHS) + per-head sigmoid(skip) gate.
    noh = noh_ref[...]
    t_masked = jnp.concatenate(
        [t_feat * noh[:, t:t + 1] for t in range(T)], axis=1).astype(bf16)   # (ta, T*F_out)
    trans = jnp.dot(t_masked, aw_ref[...], preferred_element_type=f32)       # (ta, F_out)

    out_ref[...] = (trans * alpha).astype(out_ref.dtype)


# ------------------------------------- wrapper -------------------------------------------
def _block_diag_heads(rel):
    # rel: (R, H, d_k, d_k) -> (R, H*d_k, H*d_k) block-diagonal per head
    R, H, dk, _ = rel.shape
    W = jnp.zeros((R, H * dk, H * dk), rel.dtype)
    for hh in range(H):
        W = W.at[:, hh * dk:(hh + 1) * dk, hh * dk:(hh + 1) * dk].set(rel[:, hh])
    return W


def _round_up(x, m):
    return ((x + m - 1) // m) * m


def _pow2_le(x):
    p = 1
    while p * 2 <= x:
        p *= 2
    return p


def multihead_hgt_layer(h, ntype, src_idx, etype, params, *, num_heads,
                        tile_nodes_proj=128, tile_nodes_attn=128):
    k_w, q_w, v_w, a_w, rel_pri, rel_att, rel_msg, skip = params
    N, F_in = h.shape
    T, _, F_out = k_w.shape
    R, H, d_k, _ = rel_att.shape
    assert H == num_heads and F_out == H * d_k
    DEG = src_idx.shape[1]
    f32 = jnp.float32
    bf16 = jnp.bfloat16

    # tile sizes (powers of two >= 8); pad the node count so no remainder rows are dropped.
    tp = max(8, _pow2_le(tile_nodes_proj))
    ta = max(8, _pow2_le(tile_nodes_attn))
    tile = max(tp, ta)
    Np = _round_up(N, tile)
    pad = Np - N
    h_p = jnp.pad(h.astype(f32), ((0, pad), (0, 0)))
    ntype_p = jnp.pad(ntype, (0, pad))
    src_p = jnp.pad(src_idx, ((0, pad), (0, 0)))          # padded rows gather node 0 (sliced off)
    etype_p = jnp.pad(etype, ((0, pad), (0, 0)))
    noh = jax.nn.one_hot(ntype_p, T, dtype=f32)                                # (Np, T)

    # ---------------- weight preprocessing (parameter-sized, done once in XLA) ------------
    # Kernel A: vertically stacked per-type [k|v|q] weights for the type-masked LHS.
    wkvq = jnp.concatenate([k_w, v_w, q_w], axis=2).reshape(T * F_in, 3 * F_out).astype(bf16)
    alpha_exp = jnp.repeat(jax.nn.sigmoid(skip), d_k, axis=1).astype(f32)      # (T, F_out)

    # Kernel B: per-relation [[att*pri/sqrt_dk, 0], [0, msg]] blocks stacked vertically.
    sqrt_dk = math.sqrt(F_out)            # module scales by sqrt(out_feat_dim)
    att_scaled = rel_att * (rel_pri / sqrt_dk)[:, :, None, None]
    attB = _block_diag_heads(att_scaled)                                       # (R, F_out, F_out)
    msgB = _block_diag_heads(rel_msg)
    w_rel = jnp.zeros((R, 2 * F_out, 2 * F_out), f32)
    w_rel = w_rel.at[:, :F_out, :F_out].set(attB)
    w_rel = w_rel.at[:, F_out:, F_out:].set(msgB)
    w_rel = w_rel.reshape(R * 2 * F_out, 2 * F_out).astype(bf16)

    aw_stack = a_w.reshape(T * F_out, F_out).astype(bf16)                      # (T*F_out, F_out)
    hsum = (jnp.arange(F_out)[:, None] // d_k == jnp.arange(H)[None, :]).astype(bf16)
    hexp = hsum.T

    # ---- Kernel A: bf16 [K|V] gather-source table + f32 [Q|alpha] destination table ------
    kv_table, qa_table = pl.pallas_call(
        functools.partial(_proj_kernel, T, F_out),
        grid=(Np // tp,),
        in_specs=[
            pl.BlockSpec((tp, F_in), lambda i: (i, 0)),
            pl.BlockSpec((tp, T), lambda i: (i, 0)),
            pl.BlockSpec((T * F_in, 3 * F_out), lambda i: (0, 0)),
            pl.BlockSpec((T, F_out), lambda i: (0, 0)),
        ],
        out_specs=[
            pl.BlockSpec((tp, 2 * F_out), lambda i: (i, 0)),
            pl.BlockSpec((tp, 2 * F_out), lambda i: (i, 0)),
        ],
        out_shape=[
            jax.ShapeDtypeStruct((Np, 2 * F_out), bf16),
            jax.ShapeDtypeStruct((Np, 2 * F_out), f32),
        ],
        compiler_params=pltpu.CompilerParams(dimension_semantics=("parallel",)),
    )(h_p, noh, wkvq, alpha_exp)

    # ---- XLA-side edge gather of the (small, bf16) K|V table; streamed into Kernel B -----
    src_flat = src_p.reshape(Np * DEG).astype(jnp.int32)
    kv_edges = jnp.take(kv_table, src_flat, axis=0)                            # (Np*DEG, 2*F_out) bf16
    et_flat = etype_p.reshape(Np * DEG, 1).astype(jnp.int32)

    # ---- Kernel B: attention / aggregation / update ---------------------------------------
    out = pl.pallas_call(
        functools.partial(_attn_kernel, ta, DEG, F_out, R, T, H),
        grid=(Np // ta,),
        in_specs=[
            pl.BlockSpec((ta * DEG, 2 * F_out), lambda i: (i, 0)),   # gathered edge K|V (streamed)
            pl.BlockSpec((ta, 2 * F_out), lambda i: (i, 0)),         # destination Q|alpha
            pl.BlockSpec((ta * DEG, 1), lambda i: (i, 0)),           # per-edge relation ids
            pl.BlockSpec((ta, T), lambda i: (i, 0)),                 # dst node-type one-hot
            pl.BlockSpec((R * 2 * F_out, 2 * F_out), lambda i: (0, 0)),
            pl.BlockSpec((T * F_out, F_out), lambda i: (0, 0)),
            pl.BlockSpec((F_out, H), lambda i: (0, 0)),
            pl.BlockSpec((H, F_out), lambda i: (0, 0)),
        ],
        out_specs=pl.BlockSpec((ta, F_out), lambda i: (i, 0)),
        out_shape=jax.ShapeDtypeStruct((Np, F_out), f32),
        compiler_params=pltpu.CompilerParams(
            dimension_semantics=("parallel",),
            vmem_limit_bytes=32 * 1024 * 1024),
    )(kv_edges, qa_table, et_flat, noh, w_rel, aw_stack, hsum, hexp)
    return out[:N]


# ------------------------------------ reference ------------------------------------------
def reference_forward(h, ntype, src_idx, etype, params, *, num_heads):
    k_w, q_w, v_w, a_w, rel_pri, rel_att, rel_msg, skip = params
    N, _ = h.shape
    T, _, F_out = k_w.shape
    R, H, d_k, _ = rel_att.shape
    DEG = src_idx.shape[1]
    sqrt_dk = math.sqrt(F_out)

    K = jnp.einsum('nf,nfo->no', h, k_w[ntype])
    Q = jnp.einsum('nf,nfo->no', h, q_w[ntype])
    V = jnp.einsum('nf,nfo->no', h, v_w[ntype])
    k_e = K[src_idx].reshape(N, DEG, H, d_k)
    v_e = V[src_idx].reshape(N, DEG, H, d_k)
    q_n = Q.reshape(N, H, d_k)
    kp = jnp.einsum('ndhi,ndhij->ndhj', k_e, rel_att[etype])
    vp = jnp.einsum('ndhi,ndhij->ndhj', v_e, rel_msg[etype])
    attn = jnp.einsum('ndhj,nhj->ndh', kp, q_n) * rel_pri[etype] / sqrt_dk
    a = jax.nn.softmax(attn, axis=1)
    t = jnp.sum(a[..., None] * vp, axis=1).reshape(N, F_out)
    trans = jnp.einsum('no,nop->np', t, a_w[ntype])
    alpha = jax.nn.sigmoid(skip[ntype])                     # (N, H)
    out = trans.reshape(N, H, d_k) * alpha[:, :, None]
    return out.reshape(N, F_out)


if __name__ == "__main__":
    # small shapes: 64 nodes, in-degree 8, in/out feature 32, 4 heads, 3 node types, 4 rels
    N, DEG = 64, 8
    F_in, F_out = 32, 32
    H = 4
    d_k = F_out // H
    T, R = 3, 4

    key = jax.random.PRNGKey(0)
    ks = jax.random.split(key, 10)
    scale = jnp.float32(0.1)  # scaled uniform weights (synthetic; keeps logits well-conditioned)
    k_w = jax.random.uniform(ks[0], (T, F_in, F_out), jnp.float32) * scale
    q_w = jax.random.uniform(ks[1], (T, F_in, F_out), jnp.float32) * scale
    v_w = jax.random.uniform(ks[2], (T, F_in, F_out), jnp.float32) * scale
    a_w = jax.random.uniform(ks[3], (T, F_out, F_out), jnp.float32) * scale
    rel_att = jax.random.uniform(ks[4], (R, H, d_k, d_k), jnp.float32) * scale
    rel_msg = jax.random.uniform(ks[5], (R, H, d_k, d_k), jnp.float32) * scale
    rel_pri = jnp.ones((R, H), jnp.float32)
    skip = jnp.ones((T, H), jnp.float32)
    params = (k_w, q_w, v_w, a_w, rel_pri, rel_att, rel_msg, skip)

    h = jax.random.uniform(ks[6], (N, F_in), jnp.float32)
    ntype = jax.random.randint(ks[7], (N,), 0, T)
    src_idx = jax.random.randint(ks[8], (N, DEG), 0, N)
    etype = jax.random.randint(ks[9], (N, DEG), 0, R)

    out = multihead_hgt_layer(h, ntype, src_idx, etype, params, num_heads=H)
    out = jax.block_until_ready(out)

    ref = reference_forward(h, ntype, src_idx, etype, params, num_heads=H)
    assert out.shape == (N, F_out) and out.dtype == jnp.float32
    if not bool(jnp.allclose(out, ref, rtol=5e-2, atol=5e-2)):
        raise AssertionError("Pallas kernel output does not match reference")
    print("KERNEL_OK")
</pallas_src>

<mosaic_0001>
module attributes {stable_mosaic.version = 11 : i64} {
  func.func @_proj_kernel(%arg0: i32, %arg1: memref<128x32xf32, #tpu.memory_space<vmem>>, %arg2: memref<128x3xf32, #tpu.memory_space<vmem>>, %arg3: memref<96x96xbf16, #tpu.memory_space<vmem>>, %arg4: memref<3x32xf32, #tpu.memory_space<vmem>>, %arg5: memref<128x64xbf16, #tpu.memory_space<vmem>>, %arg6: memref<128x64xf32, #tpu.memory_space<vmem>>) attributes {dimension_semantics = [#tpu.dimension_semantics<parallel>], iteration_bounds = array<i64: 1>, scalar_prefetch = 0 : i64, scratch_operands = 0 : i64, tpu.core_type = #tpu.core_type<tc>, window_params = [{transform_indices = @transform_0, window_bounds = array<i64: 128, 32>}, {transform_indices = @transform_1, window_bounds = array<i64: 128, 3>}, {pipeline_mode = #tpu.pipeline_mode<synchronous>, transform_indices = @transform_2, window_bounds = array<i64: 96, 96>}, {pipeline_mode = #tpu.pipeline_mode<synchronous>, transform_indices = @transform_3, window_bounds = array<i64: 3, 32>}, {transform_indices = @transform_4, window_bounds = array<i64: 128, 64>}, {transform_indices = @transform_5, window_bounds = array<i64: 128, 64>}]} {
    %c0 = arith.constant 0 : index
    %c0_0 = arith.constant 0 : index
    %0 = vector.load %arg1[%c0, %c0_0] : memref<128x32xf32, #tpu.memory_space<vmem>>, vector<128x32xf32>
    %c0_1 = arith.constant 0 : index
    %c0_2 = arith.constant 0 : index
    %1 = vector.load %arg2[%c0_1, %c0_2] : memref<128x3xf32, #tpu.memory_space<vmem>>, vector<128x3xf32>
    %2 = vector.extract_strided_slice %1 {offsets = [0, 0], sizes = [128, 1], strides = [1, 1]} : vector<128x3xf32> to vector<128x1xf32>
    %3 = vector.broadcast %2 : vector<128x1xf32> to vector<128x32xf32>
    %4 = arith.mulf %0, %3 : vector<128x32xf32>
    %5 = vector.extract_strided_slice %1 {offsets = [0, 1], sizes = [128, 1], strides = [1, 1]} : vector<128x3xf32> to vector<128x1xf32>
    %6 = vector.broadcast %5 : vector<128x1xf32> to vector<128x32xf32>
    %7 = arith.mulf %0, %6 : vector<128x32xf32>
    %8 = vector.extract_strided_slice %1 {offsets = [0, 2], sizes = [128, 1], strides = [1, 1]} : vector<128x3xf32> to vector<128x1xf32>
    %9 = vector.broadcast %8 : vector<128x1xf32> to vector<128x32xf32>
    %10 = arith.mulf %0, %9 : vector<128x32xf32>
    %11 = tpu.concatenate %4, %7, %10 in 1 : vector<128x32xf32>, vector<128x32xf32>, vector<128x32xf32> -> vector<128x96xf32>
    %12 = arith.truncf %11 : vector<128x96xf32> to vector<128x96xbf16>
    %c0_3 = arith.constant 0 : index
    %c0_4 = arith.constant 0 : index
    %13 = vector.load %arg3[%c0_3, %c0_4] : memref<96x96xbf16, #tpu.memory_space<vmem>>, vector<96x96xbf16>
    %cst = arith.constant dense<0.000000e+00> : vector<128x96xf32>
    %14 = tpu.matmul %12, %13, %cst {dimension_numbers = #tpu.dot_dimension_numbers<[1], [0], [0], [1], [0, 0, 1, 1], [], []>} : vector<128x96xbf16>, vector<96x96xbf16>, vector<128x96xf32> -> vector<128x96xf32>
    %c0_5 = arith.constant 0 : index
    %c0_6 = arith.constant 0 : index
    %15 = vector.load %arg4[%c0_5, %c0_6] : memref<3x32xf32, #tpu.memory_space<vmem>>, vector<3x32xf32>
    %16 = vector.extract_strided_slice %1 {offsets = [0, 0], sizes = [128, 1], strides = [1, 1]} : vector<128x3xf32> to vector<128x1xf32>
    %17 = vector.extract_strided_slice %15 {offsets = [0, 0], sizes = [1, 32], strides = [1, 1]} : vector<3x32xf32> to vector<1x32xf32>
    %18 = vector.broadcast %16 : vector<128x1xf32> to vector<128x32xf32>
    %19 = vector.broadcast %17 : vector<1x32xf32> to vector<128x32xf32>
    %20 = arith.mulf %18, %19 : vector<128x32xf32>
    %21 = vector.extract_strided_slice %1 {offsets = [0, 1], sizes = [128, 1], strides = [1, 1]} : vector<128x3xf32> to vector<128x1xf32>
    %22 = vector.extract_strided_slice %15 {offsets = [1, 0], sizes = [1, 32], strides = [1, 1]} : vector<3x32xf32> to vector<1x32xf32>
    %23 = vector.broadcast %21 : vector<128x1xf32> to vector<128x32xf32>
    %24 = vector.broadcast %22 : vector<1x32xf32> to vector<128x32xf32>
    %25 = arith.mulf %23, %24 : vector<128x32xf32>
    %26 = arith.addf %20, %25 : vector<128x32xf32>
    %27 = vector.extract_strided_slice %1 {offsets = [0, 2], sizes = [128, 1], strides = [1, 1]} : vector<128x3xf32> to vector<128x1xf32>
    %28 = vector.extract_strided_slice %15 {offsets = [2, 0], sizes = [1, 32], strides = [1, 1]} : vector<3x32xf32> to vector<1x32xf32>
    %29 = vector.broadcast %27 : vector<128x1xf32> to vector<128x32xf32>
    %30 = vector.broadcast %28 : vector<1x32xf32> to vector<128x32xf32>
    %31 = arith.mulf %29, %30 : vector<128x32xf32>
    %32 = arith.addf %26, %31 : vector<128x32xf32>
    %33 = vector.extract_strided_slice %14 {offsets = [0, 0], sizes = [128, 64], strides = [1, 1]} : vector<128x96xf32> to vector<128x64xf32>
    %34 = arith.truncf %33 : vector<128x64xf32> to vector<128x64xbf16>
    %c0_7 = arith.constant 0 : index
    %c0_8 = arith.constant 0 : index
    %35 = vector.load %arg5[%c0_7, %c0_8] : memref<128x64xbf16, #tpu.memory_space<vmem>>, vector<128x64xbf16>
    tpu.vector_store %arg5[%c0_7, %c0_8], %34 {strides = array<i32>} : memref<128x64xbf16, #tpu.memory_space<vmem>>, vector<128x64xbf16>,
    %36 = vector.extract_strided_slice %14 {offsets = [0, 64], sizes = [128, 32], strides = [1, 1]} : vector<128x96xf32> to vector<128x32xf32>
    %37 = tpu.concatenate %36, %32 in 1 : vector<128x32xf32>, vector<128x32xf32> -> vector<128x64xf32>
    %c0_9 = arith.constant 0 : index
    %c0_10 = arith.constant 0 : index
    %38 = vector.load %arg6[%c0_9, %c0_10] : memref<128x64xf32, #tpu.memory_space<vmem>>, vector<128x64xf32>
    tpu.vector_store %arg6[%c0_9, %c0_10], %37 {strides = array<i32>} : memref<128x64xf32, #tpu.memory_space<vmem>>, vector<128x64xf32>,
    return
  }
  func.func @transform_0(%arg0: i32) -> (i32, i32) {
    %c0_i32 = arith.constant 0 : i32
    %c0_i32_0 = arith.constant 0 : i32
    return %arg0, %c0_i32 : i32, i32
  }
  func.func @transform_1(%arg0: i32) -> (i32, i32) {
    %c0_i32 = arith.constant 0 : i32
    %c0_i32_0 = arith.constant 0 : i32
    return %arg0, %c0_i32 : i32, i32
  }
  func.func @transform_2(%arg0: i32) -> (i32, i32) {
    %c0_i32 = arith.constant 0 : i32
    %c0_i32_0 = arith.constant 0 : i32
    %c0_i32_1 = arith.constant 0 : i32
    return %c0_i32, %c0_i32_0 : i32, i32
  }
  func.func @transform_3(%arg0: i32) -> (i32, i32) {
    %c0_i32 = arith.constant 0 : i32
    %c0_i32_0 = arith.constant 0 : i32
    %c0_i32_1 = arith.constant 0 : i32
    return %c0_i32, %c0_i32_0 : i32, i32
  }
  func.func @transform_4(%arg0: i32) -> (i32, i32) {
    %c0_i32 = arith.constant 0 : i32
    %c0_i32_0 = arith.constant 0 : i32
    return %arg0, %c0_i32 : i32, i32
  }
  func.func @transform_5(%arg0: i32) -> (i32, i32) {
    %c0_i32 = arith.constant 0 : i32
    %c0_i32_0 = arith.constant 0 : i32
    return %arg0, %c0_i32 : i32, i32
  }
}

</mosaic_0001>

<llo_original>
// kernel: tpu_custom_call.1
$region0: #{tpu_custom_call.1}
  #allocation0 [shape = 'u32[]', space=smem, size = 0x4, offset = 0x4, fixed_abs, tag = 'smem constant byte address 0x4 - core index']
  #allocation1 [shape = 'u32[144,128]{1,0:T(1,128)}', space=vmem, size = 0x12000, scoped, tag = 'internal scratch']
  %s0 = inlined_call_operand.vmem [shape: f32[128,32], index: 0, kind: input, shape index: {}]
  %s1 = inlined_call_operand.vmem [shape: f32[128,3], index: 1, kind: input, shape index: {}]
  %s2 = inlined_call_operand.vmem [shape: bf16[96,96], index: 2, kind: input, shape index: {}]
  %s3 = inlined_call_operand.vmem [shape: f32[3,32], index: 3, kind: input, shape index: {}]
  %s4 = inlined_call_operand.vmem [shape: bf16[128,64], index: 4, kind: output, shape index: {0}]
  %s5 = inlined_call_operand.vmem [shape: f32[128,64], index: 5, kind: output, shape index: {1}]
  %6 = xla_tuple %s4, %s5
  %s7 = sld [smem:[#allocation0]]
  $region34: #{tpu_custom_call.1} parent=0
    _
  %s9 = ssub.s32 1, %s7
  %s10 = scalar_select 0, %s9, %s7
  // Predicated region
  $region2: #{tpu_custom_call.1} parent=0 // pred_check
    _
  $region3: #{tpu_custom_call.1} parent=0 // pred_check_branch
    %12 = sbr.rel (0) target = $region5
  $region4: #{tpu_custom_call.1} parent=0 // pred_region
    _
  $region5: #{tpu_custom_call.1} parent=0 // pred_fallthru
    _
  // Predicated region
  $region6: #{tpu_custom_call.1} parent=0 // pred_check
    _
  $region7: #{tpu_custom_call.1} parent=0 // pred_check_branch
    %14 = sbr.rel (0) target = $region9
  $region8: #{tpu_custom_call.1} parent=0 // pred_region
    _
  $region9: #{tpu_custom_call.1} parent=0 // pred_fallthru
    _
  // Predicated region
  $region10: #{tpu_custom_call.1} parent=0 // pred_check
    _
  $region11: #{tpu_custom_call.1} parent=0 // pred_check_branch
    %16 = sbr.rel (0) target = $region13
  $region12: #{tpu_custom_call.1} parent=0 // pred_region
    _
  $region13: #{tpu_custom_call.1} parent=0 // pred_fallthru
    _
  // Predicated region
  $region14: #{tpu_custom_call.1} parent=0 // pred_check
    _
  $region15: #{tpu_custom_call.1} parent=0 // pred_check_branch
    %18 = sbr.rel (0) target = $region17
  $region16: #{tpu_custom_call.1} parent=0 // pred_region
    _
  $region17: #{tpu_custom_call.1} parent=0 // pred_fallthru
    _
  %v20 = vld [vmem:[%s0] sm:$0xff]
  %v21 = vld [vmem:[%s0 + $0x8] sm:$0xff]
  %v22 = vld [vmem:[%s0 + $0x10] sm:$0xff]
  %v23 = vld [vmem:[%s0 + $0x18] sm:$0xff]
  %v24 = vld [vmem:[%s0 + $0x20] sm:$0xff]
  %v25 = vld [vmem:[%s0 + $0x28] sm:$0xff]
  %v26 = vld [vmem:[%s0 + $0x30] sm:$0xff]
  %v27 = vld [vmem:[%s0 + $0x38] sm:$0xff]
  %v28 = vld [vmem:[%s0 + $0x40] sm:$0xff]
  %v29 = vld [vmem:[%s0 + $0x48] sm:$0xff]
  %v30 = vld [vmem:[%s0 + $0x50] sm:$0xff]
  %v31 = vld [vmem:[%s0 + $0x58] sm:$0xff]
  %v32 = vld [vmem:[%s0 + $0x60] sm:$0xff]
  %v33 = vld [vmem:[%s0 + $0x68] sm:$0xff]
  %v34 = vld [vmem:[%s0 + $0x70] sm:$0xff]
  %v35 = vld [vmem:[%s0 + $0x78] sm:$0xff]
  %v36 = vld [vmem:[%s1] sm:$0xff]
  %v37 = vld [vmem:[%s1 + $0x8] sm:$0xff]
  %v38 = vld [vmem:[%s1 + $0x10] sm:$0xff]
  %v39 = vld [vmem:[%s1 + $0x18] sm:$0xff]
  %v40 = vld [vmem:[%s1 + $0x20] sm:$0xff]
  %v41 = vld [vmem:[%s1 + $0x28] sm:$0xff]
  %v42 = vld [vmem:[%s1 + $0x30] sm:$0xff]
  %v43 = vld [vmem:[%s1 + $0x38] sm:$0xff]
  %v44 = vld [vmem:[%s1 + $0x40] sm:$0xff]
  %v45 = vld [vmem:[%s1 + $0x48] sm:$0xff]
  %v46 = vld [vmem:[%s1 + $0x50] sm:$0xff]
  %v47 = vld [vmem:[%s1 + $0x58] sm:$0xff]
  %v48 = vld [vmem:[%s1 + $0x60] sm:$0xff]
  %v49 = vld [vmem:[%s1 + $0x68] sm:$0xff]
  %v50 = vld [vmem:[%s1 + $0x70] sm:$0xff]
  %v51 = vld [vmem:[%s1 + $0x78] sm:$0xff]
  %53 = vset.pattern.permute.xlu0 0
  %54 = vperm.xlu0 %53, %v36
  %v55 = vpop.permute.xlu0 %54
  %58 = vset.pattern.permute.xlu0 0
  %59 = vperm.xlu0 %58, %v37
  %v60 = vpop.permute.xlu0 %59
  %63 = vset.pattern.permute.xlu0 0
  %64 = vperm.xlu0 %63, %v38
  %v65 = vpop.permute.xlu0 %64
  %68 = vset.pattern.permute.xlu0 0
  %69 = vperm.xlu0 %68, %v39
  %v70 = vpop.permute.xlu0 %69
  %73 = vset.pattern.permute.xlu0 0
  %74 = vperm.xlu0 %73, %v40
  %v75 = vpop.permute.xlu0 %74
  %78 = vset.pattern.permute.xlu0 0
  %79 = vperm.xlu0 %78, %v41
  %v80 = vpop.permute.xlu0 %79
  %83 = vset.pattern.permute.xlu0 0
  %84 = vperm.xlu0 %83, %v42
  %v85 = vpop.permute.xlu0 %84
  %88 = vset.pattern.permute.xlu0 0
  %89 = vperm.xlu0 %88, %v43
  %v90 = vpop.permute.xlu0 %89
  %93 = vset.pattern.permute.xlu0 0
  %94 = vperm.xlu0 %93, %v44
  %v95 = vpop.permute.xlu0 %94
  %98 = vset.pattern.permute.xlu0 0
  %99 = vperm.xlu0 %98, %v45
  %v100 = vpop.permute.xlu0 %99
  %103 = vset.pattern.permute.xlu0 0
  %104 = vperm.xlu0 %103, %v46
  %v105 = vpop.permute.xlu0 %104
  %108 = vset.pattern.permute.xlu0 0
  %109 = vperm.xlu0 %108, %v47
  %v110 = vpop.permute.xlu0 %109
  %113 = vset.pattern.permute.xlu0 0
  %114 = vperm.xlu0 %113, %v48
  %v115 = vpop.permute.xlu0 %114
  %118 = vset.pattern.permute.xlu0 0
  %119 = vperm.xlu0 %118, %v49
  %v120 = vpop.permute.xlu0 %119
  %123 = vset.pattern.permute.xlu0 0
  %124 = vperm.xlu0 %123, %v50
  %v125 = vpop.permute.xlu0 %124
  %128 = vset.pattern.permute.xlu0 0
  %129 = vperm.xlu0 %128, %v51
  %v130 = vpop.permute.xlu0 %129
  %v132 = vmul.f32 %v20, %v55
  %v133 = vmul.f32 %v21, %v60
  %v134 = vmul.f32 %v22, %v65
  %v135 = vmul.f32 %v23, %v70
  %v136 = vmul.f32 %v24, %v75
  %v137 = vmul.f32 %v25, %v80
  %v138 = vmul.f32 %v26, %v85
  %v139 = vmul.f32 %v27, %v90
  %v140 = vmul.f32 %v28, %v95
  %v141 = vmul.f32 %v29, %v100
  %v142 = vmul.f32 %v30, %v105
  %v143 = vmul.f32 %v31, %v110
  %v144 = vmul.f32 %v32, %v115
  %v145 = vmul.f32 %v33, %v120
  %v146 = vmul.f32 %v34, %v125
  %v147 = vmul.f32 %v35, %v130
  %148 = vset.pattern.permute.xlu0 1
  %149 = vperm.xlu0 %148, %v36
  %v150 = vpop.permute.xlu0 %149
  %152 = vset.pattern.permute.xlu0 1
  %153 = vperm.xlu0 %152, %v37
  %v154 = vpop.permute.xlu0 %153
  %156 = vset.pattern.permute.xlu0 1
  %157 = vperm.xlu0 %156, %v38
  %v158 = vpop.permute.xlu0 %157
  %160 = vset.pattern.permute.xlu0 1
  %161 = vperm.xlu0 %160, %v39
  %v162 = vpop.permute.xlu0 %161
  %164 = vset.pattern.permute.xlu0 1
  %165 = vperm.xlu0 %164, %v40
  %v166 = vpop.permute.xlu0 %165
  %168 = vset.pattern.permute.xlu0 1
  %169 = vperm.xlu0 %168, %v41
  %v170 = vpop.permute.xlu0 %169
  %172 = vset.pattern.permute.xlu0 1
  %173 = vperm.xlu0 %172, %v42
  %v174 = vpop.permute.xlu0 %173
  %176 = vset.pattern.permute.xlu0 1
  %177 = vperm.xlu0 %176, %v43
  %v178 = vpop.permute.xlu0 %177
  %180 = vset.pattern.permute.xlu0 1
  %181 = vperm.xlu0 %180, %v44
  %v182 = vpop.permute.xlu0 %181
  %184 = vset.pattern.permute.xlu0 1
  %185 = vperm.xlu0 %184, %v45
  %v186 = vpop.permute.xlu0 %185
  %188 = vset.pattern.permute.xlu0 1
  %189 = vperm.xlu0 %188, %v46
  %v190 = vpop.permute.xlu0 %189
  %192 = vset.pattern.permute.xlu0 1
  %193 = vperm.xlu0 %192, %v47
  %v194 = vpop.permute.xlu0 %193
  %196 = vset.pattern.permute.xlu0 1
  %197 = vperm.xlu0 %196, %v48
  %v198 = vpop.permute.xlu0 %197
  %200 = vset.pattern.permute.xlu0 1
  %201 = vperm.xlu0 %200, %v49
  %v202 = vpop.permute.xlu0 %201
  %204 = vset.pattern.permute.xlu0 1
  %205 = vperm.xlu0 %204, %v50
  %v206 = vpop.permute.xlu0 %205
  %208 = vset.pattern.permute.xlu0 1
  %209 = vperm.xlu0 %208, %v51
  %v210 = vpop.permute.xlu0 %209
  %v212 = vmul.f32 %v20, %v150
  %v213 = vmul.f32 %v21, %v154
  %v214 = vmul.f32 %v22, %v158
  %v215 = vmul.f32 %v23, %v162
  %v216 = vmul.f32 %v24, %v166
  %v217 = vmul.f32 %v25, %v170
  %v218 = vmul.f32 %v26, %v174
  %v219 = vmul.f32 %v27, %v178
  %v220 = vmul.f32 %v28, %v182
  %v221 = vmul.f32 %v29, %v186
  %v222 = vmul.f32 %v30, %v190
  %v223 = vmul.f32 %v31, %v194
  %v224 = vmul.f32 %v32, %v198
  %v225 = vmul.f32 %v33, %v202
  %v226 = vmul.f32 %v34, %v206
  %v227 = vmul.f32 %v35, %v210
  %228 = vset.pattern.permute.xlu0 2
  %229 = vperm.xlu0 %228, %v36
  %v230 = vpop.permute.xlu0 %229
  %232 = vset.pattern.permute.xlu0 2
  %233 = vperm.xlu0 %232, %v37
  %v234 = vpop.permute.xlu0 %233
  %236 = vset.pattern.permute.xlu0 2
  %237 = vperm.xlu0 %236, %v38
  %v238 = vpop.permute.xlu0 %237
  %240 = vset.pattern.permute.xlu0 2
  %241 = vperm.xlu0 %240, %v39
  %v242 = vpop.permute.xlu0 %241
  %244 = vset.pattern.permute.xlu0 2
  %245 = vperm.xlu0 %244, %v40
  %v246 = vpop.permute.xlu0 %245
  %248 = vset.pattern.permute.xlu0 2
  %249 = vperm.xlu0 %248, %v41
  %v250 = vpop.permute.xlu0 %249
  %252 = vset.pattern.permute.xlu0 2
  %253 = vperm.xlu0 %252, %v42
  %v254 = vpop.permute.xlu0 %253
  %256 = vset.pattern.permute.xlu0 2
  %257 = vperm.xlu0 %256, %v43
  %v258 = vpop.permute.xlu0 %257
  %260 = vset.pattern.permute.xlu0 2
  %261 = vperm.xlu0 %260, %v44
  %v262 = vpop.permute.xlu0 %261
  %264 = vset.pattern.permute.xlu0 2
  %265 = vperm.xlu0 %264, %v45
  %v266 = vpop.permute.xlu0 %265
  %268 = vset.pattern.permute.xlu0 2
  %269 = vperm.xlu0 %268, %v46
  %v270 = vpop.permute.xlu0 %269
  %272 = vset.pattern.permute.xlu0 2
  %273 = vperm.xlu0 %272, %v47
  %v274 = vpop.permute.xlu0 %273
  %276 = vset.pattern.permute.xlu0 2
  %277 = vperm.xlu0 %276, %v48
  %v278 = vpop.permute.xlu0 %277
  %280 = vset.pattern.permute.xlu0 2
  %281 = vperm.xlu0 %280, %v49
  %v282 = vpop.permute.xlu0 %281
  %284 = vset.pattern.permute.xlu0 2
  %285 = vperm.xlu0 %284, %v50
  %v286 = vpop.permute.xlu0 %285
  %288 = vset.pattern.permute.xlu0 2
  %289 = vperm.xlu0 %288, %v51
  %v290 = vpop.permute.xlu0 %289
  %v292 = vmul.f32 %v20, %v230
  %v293 = vmul.f32 %v21, %v234
  %v294 = vmul.f32 %v22, %v238
  %v295 = vmul.f32 %v23, %v242
  %v296 = vmul.f32 %v24, %v246
  %v297 = vmul.f32 %v25, %v250
  %v298 = vmul.f32 %v26, %v254
  %v299 = vmul.f32 %v27, %v258
  %v300 = vmul.f32 %v28, %v262
  %v301 = vmul.f32 %v29, %v266
  %v302 = vmul.f32 %v30, %v270
  %v303 = vmul.f32 %v31, %v274
  %v304 = vmul.f32 %v32, %v278
  %v305 = vmul.f32 %v33, %v282
  %v306 = vmul.f32 %v34, %v286
  %v307 = vmul.f32 %v35, %v290
  %324 = vrot.lane.b32.xlu0 %v212, 32
  %v325 = vpop.permute.xlu0 %324
  %326 = vrot.lane.b32.xlu0 %v213, 32
  %v327 = vpop.permute.xlu0 %326
  %328 = vrot.lane.b32.xlu0 %v214, 32
  %v329 = vpop.permute.xlu0 %328
  %330 = vrot.lane.b32.xlu0 %v215, 32
  %v331 = vpop.permute.xlu0 %330
  %332 = vrot.lane.b32.xlu0 %v216, 32
  %v333 = vpop.permute.xlu0 %332
  %334 = vrot.lane.b32.xlu0 %v217, 32
  %v335 = vpop.permute.xlu0 %334
  %336 = vrot.lane.b32.xlu0 %v218, 32
  %v337 = vpop.permute.xlu0 %336
  %338 = vrot.lane.b32.xlu0 %v219, 32
  %v339 = vpop.permute.xlu0 %338
  %340 = vrot.lane.b32.xlu0 %v220, 32
  %v341 = vpop.permute.xlu0 %340
  %342 = vrot.lane.b32.xlu0 %v221, 32
  %v343 = vpop.permute.xlu0 %342
  %344 = vrot.lane.b32.xlu0 %v222, 32
  %v345 = vpop.permute.xlu0 %344
  %346 = vrot.lane.b32.xlu0 %v223, 32
  %v347 = vpop.permute.xlu0 %346
  %348 = vrot.lane.b32.xlu0 %v224, 32
  %v349 = vpop.permute.xlu0 %348
  %350 = vrot.lane.b32.xlu0 %v225, 32
  %v351 = vpop.permute.xlu0 %350
  %352 = vrot.lane.b32.xlu0 %v226, 32
  %v353 = vpop.permute.xlu0 %352
  %354 = vrot.lane.b32.xlu0 %v227, 32
  %v355 = vpop.permute.xlu0 %354
  %388 = vrot.lane.b32.xlu0 %v292, 64
  %v389 = vpop.permute.xlu0 %388
  %390 = vrot.lane.b32.xlu0 %v293, 64
  %v391 = vpop.permute.xlu0 %390
  %392 = vrot.lane.b32.xlu0 %v294, 64
  %v393 = vpop.permute.xlu0 %392
  %394 = vrot.lane.b32.xlu0 %v295, 64
  %v395 = vpop.permute.xlu0 %394
  %396 = vrot.lane.b32.xlu0 %v296, 64
  %v397 = vpop.permute.xlu0 %396
  %398 = vrot.lane.b32.xlu0 %v297, 64
  %v399 = vpop.permute.xlu0 %398
  %400 = vrot.lane.b32.xlu0 %v298, 64
  %v401 = vpop.permute.xlu0 %400
  %402 = vrot.lane.b32.xlu0 %v299, 64
  %v403 = vpop.permute.xlu0 %402
  %404 = vrot.lane.b32.xlu0 %v300, 64
  %v405 = vpop.permute.xlu0 %404
  %406 = vrot.lane.b32.xlu0 %v301, 64
  %v407 = vpop.permute.xlu0 %406
  %408 = vrot.lane.b32.xlu0 %v302, 64
  %v409 = vpop.permute.xlu0 %408
  %410 = vrot.lane.b32.xlu0 %v303, 64
  %v411 = vpop.permute.xlu0 %410
  %412 = vrot.lane.b32.xlu0 %v304, 64
  %v413 = vpop.permute.xlu0 %412
  %414 = vrot.lane.b32.xlu0 %v305, 64
  %v415 = vpop.permute.xlu0 %414
  %416 = vrot.lane.b32.xlu0 %v306, 64
  %v417 = vpop.permute.xlu0 %416
  %418 = vrot.lane.b32.xlu0 %v307, 64
  %v419 = vpop.permute.xlu0 %418
  %vm436 = vcmask 261120
  %v437 = vsel %vm436, %v132, %v325
  %v438 = vsel %vm436, %v133, %v327
  %v439 = vsel %vm436, %v134, %v329
  %v440 = vsel %vm436, %v135, %v331
  %v441 = vsel %vm436, %v136, %v333
  %v442 = vsel %vm436, %v137, %v335
  %v443 = vsel %vm436, %v138, %v337
  %v444 = vsel %vm436, %v139, %v339
  %v445 = vsel %vm436, %v140, %v341
  %v446 = vsel %vm436, %v141, %v343
  %v447 = vsel %vm436, %v142, %v345
  %v448 = vsel %vm436, %v143, %v347
  %v449 = vsel %vm436, %v144, %v349
  %v450 = vsel %vm436, %v145, %v351
  %v451 = vsel %vm436, %v146, %v353
  %v452 = vsel %vm436, %v147, %v355
  %vm453 = vcmask 523264
  %v454 = vsel %vm453, %v437, %v389
  %v455 = vsel %vm453, %v438, %v391
  %v456 = vsel %vm453, %v439, %v393
  %v457 = vsel %vm453, %v440, %v395
  %v458 = vsel %vm453, %v441, %v397
  %v459 = vsel %vm453, %v442, %v399
  %v460 = vsel %vm453, %v443, %v401
  %v461 = vsel %vm453, %v444, %v403
  %v462 = vsel %vm453, %v445, %v405
  %v463 = vsel %vm453, %v446, %v407
  %v464 = vsel %vm453, %v447, %v409
  %v465 = vsel %vm453, %v448, %v411
  %v466 = vsel %vm453, %v449, %v413
  %v467 = vsel %vm453, %v450, %v415
  %v468 = vsel %vm453, %v451, %v417
  %v469 = vsel %vm453, %v452, %v419
  %v470 = vpack.c.bf16 %v455, %v454
  %v471 = vpack.c.bf16 %v457, %v456
  %v472 = vpack.c.bf16 %v459, %v458
  %v473 = vpack.c.bf16 %v461, %v460
  %v474 = vpack.c.bf16 %v463, %v462
  %v475 = vpack.c.bf16 %v465, %v464
  %v476 = vpack.c.bf16 %v467, %v466
  %v477 = vpack.c.bf16 %v469, %v468
  %v478 = vld [vmem:[%s2] sm:$0xf]
  %v479 = vld [vmem:[%s2 + $0x4] sm:$0xf]
  %v480 = vld [vmem:[%s2 + $0x8] sm:$0xf]
  %v481 = vld [vmem:[%s2 + $0xc] sm:$0xf]
  %v482 = vld [vmem:[%s2 + $0x10] sm:$0xf]
  %v483 = vld [vmem:[%s2 + $0x14] sm:$0xf]
  %v484 = vld [vmem:[%s2 + $0x18] sm:$0xf]
  %v485 = vld [vmem:[%s2 + $0x1c] sm:$0xf]
  %v486 = vld [vmem:[%s2 + $0x20] sm:$0xf]
  %v487 = vld [vmem:[%s2 + $0x24] sm:$0xf]
  %v488 = vld [vmem:[%s2 + $0x28] sm:$0xf]
  %v489 = vld [vmem:[%s2 + $0x2c] sm:$0xf]
  %v502 = vunpack.c.l.b16 %v478
  %v503 = vunpack.c.l.b16 %v479
  %v504 = vunpack.c.l.b16 %v480
  %v505 = vunpack.c.l.b16 %v481
  %v506 = vunpack.c.l.b16 %v482
  %v507 = vunpack.c.l.b16 %v483
  %v508 = vunpack.c.l.b16 %v484
  %v509 = vunpack.c.l.b16 %v485
  %v510 = vunpack.c.l.b16 %v486
  %v511 = vunpack.c.l.b16 %v487
  %v512 = vunpack.c.l.b16 %v488
  %v513 = vunpack.c.l.b16 %v489
  %v514 = vpack.c.b16 %v503, %v502
  %v515 = vpack.c.b16 %v505, %v504
  %v516 = vpack.c.b16 %v507, %v506
  %v517 = vpack.c.b16 %v509, %v508
  %v518 = vpack.c.b16 %v511, %v510
  %v519 = vpack.c.b16 %v513, %v512
  %vm526 = vcmask 785408
  %v528 = vsel %vm526, %v470, 0
  %v531 = vsel %vm526, %v471, 0
  %v534 = vsel %vm526, %v472, 0
  %v537 = vsel %vm526, %v473, 0
  %v540 = vsel %vm526, %v474, 0
  %v543 = vsel %vm526, %v475, 0
  %v546 = vsel %vm526, %v476, 0
  %v549 = vsel %vm526, %v477, 0
  %551 = vmatprep.subr.bf16.mxu0 0
  %552 = vmatpush1.bf16.msra.mxu0 0
  %553 = vmatprep.subr.bf16.mxu0 0
  %554 = vmatpush1.bf16.msra.mxu0 0
  %555 = vmatprep.subr.bf16.mxu0 0
  %556 = vmatpush1.bf16.msra.mxu0 %v519
  %557 = vmatprep.subr.bf16.mxu0 0
  %558 = vmatpush1.bf16.msra.mxu0 %v518
  %559 = vmatprep.subr.bf16.mxu0 0
  %560 = vmatpush1.bf16.msra.mxu0 %v517
  %561 = vmatprep.subr.bf16.mxu0 0
  %562 = vmatpush1.bf16.msra.mxu0 %v516
  %563 = vmatprep.subr.bf16.mxu0 0
  %564 = vmatpush1.bf16.msra.mxu0 %v515
  %565 = vmatprep.subr.bf16.mxu0 0
  %566 = vmatpush1.bf16.msra.mxu0 %v514
  %567 = vmatprep.subr.bf16.mxu0 0
  %568 = vmatpush2.bf16.msra.mxu0 0
  %569 = vmatprep.subr.bf16.mxu0 0
  %570 = vmatpush2.bf16.msra.mxu0 0
  %571 = vmatprep.subr.bf16.mxu0 0
  %572 = vmatpush2.bf16.msra.mxu0 0
  %573 = vmatprep.subr.bf16.mxu0 0
  %574 = vmatpush2.bf16.msra.mxu0 0
  %575 = vmatprep.subr.bf16.mxu0 0
  %576 = vmatpush2.bf16.msra.mxu0 0
  %577 = vmatprep.subr.bf16.mxu0 0
  %578 = vmatpush2.bf16.msra.mxu0 0
  %579 = vmatprep.subr.bf16.mxu0 0
  %580 = vmatpush2.bf16.msra.mxu0 0
  %581 = vmatprep.subr.bf16.mxu0 0
  %582 = vmatpush2.bf16.msra.mxu0 0
  %583 = vmatprep.mubr.bf16.mxu0 0
  %584 = vmatmul.mubr.bf16.gmra.mxu0 %v528
  %v585 = vpop.f32.mrf.mxu0
  %v586 = vadd.f32 0.0, %v585
  %v587 = vpop.f32.mrf.mxu0
  %v588 = vpop.f32.mrf.mxu0
  %v589 = vadd.f32 0.0, %v588
  %v590 = vpop.f32.mrf.mxu0
  %591 = vmatprep.mubr.bf16.mxu0 0
  %592 = vmatmul.mubr.bf16.gmra.mxu0 %v531
  %v593 = vpop.f32.mrf.mxu0
  %v594 = vadd.f32 0.0, %v593
  %v595 = vpop.f32.mrf.mxu0
  %v596 = vpop.f32.mrf.mxu0
  %v597 = vadd.f32 0.0, %v596
  %v598 = vpop.f32.mrf.mxu0
  %599 = vmatprep.mubr.bf16.mxu0 0
  %600 = vmatmul.mubr.bf16.gmra.mxu0 %v534
  %v601 = vpop.f32.mrf.mxu0
  %v602 = vadd.f32 0.0, %v601
  %v603 = vpop.f32.mrf.mxu0
  %v604 = vpop.f32.mrf.mxu0
  %v605 = vadd.f32 0.0, %v604
  %v606 = vpop.f32.mrf.mxu0
  %607 = vmatprep.mubr.bf16.mxu0 0
  %608 = vmatmul.mubr.bf16.gmra.mxu0 %v537
  %v609 = vpop.f32.mrf.mxu0
  %v610 = vadd.f32 0.0, %v609
  %v611 = vpop.f32.mrf.mxu0
  %v612 = vpop.f32.mrf.mxu0
  %v613 = vadd.f32 0.0, %v612
  %v614 = vpop.f32.mrf.mxu0
  %615 = vmatprep.mubr.bf16.mxu0 0
  %616 = vmatmul.mubr.bf16.gmra.mxu0 %v540
  %v617 = vpop.f32.mrf.mxu0
  %v618 = vadd.f32 0.0, %v617
  %v619 = vpop.f32.mrf.mxu0
  %v620 = vpop.f32.mrf.mxu0
  %v621 = vadd.f32 0.0, %v620
  %v622 = vpop.f32.mrf.mxu0
  %623 = vmatprep.mubr.bf16.mxu0 0
  %624 = vmatmul.mubr.bf16.gmra.mxu0 %v543
  %v625 = vpop.f32.mrf.mxu0
  %v626 = vadd.f32 0.0, %v625
  %v627 = vpop.f32.mrf.mxu0
  %v628 = vpop.f32.mrf.mxu0
  %v629 = vadd.f32 0.0, %v628
  %v630 = vpop.f32.mrf.mxu0
  %631 = vmatprep.mubr.bf16.mxu0 0
  %632 = vmatmul.mubr.bf16.gmra.mxu0 %v546
  %v633 = vpop.f32.mrf.mxu0
  %v634 = vadd.f32 0.0, %v633
  %v635 = vpop.f32.mrf.mxu0
  %v636 = vpop.f32.mrf.mxu0
  %v637 = vadd.f32 0.0, %v636
  %v638 = vpop.f32.mrf.mxu0
  %639 = vmatprep.mubr.bf16.mxu0 0
  %640 = vmatmul.mubr.bf16.gmra.mxu0 %v549
  %v641 = vpop.f32.mrf.mxu0
  %v642 = vadd.f32 0.0, %v641
  %v643 = vpop.f32.mrf.mxu0
  %v644 = vpop.f32.mrf.mxu0
  %v645 = vadd.f32 0.0, %v644
  %v646 = vpop.f32.mrf.mxu0
  %647 = vdwg.mxu0
  %v648 = vld [vmem:[%s3] sm:$0x7]
  %v649 = vlaneseq
  %v650 = vshrl.u32 %v649, 7
  %v651 = vsub.s32 0, %v650
  %v652 = vrot.slane %v648, %v651
  %v653 = vmul.f32 %v55, %v652
  %v654 = vmul.f32 %v60, %v652
  %v655 = vmul.f32 %v65, %v652
  %v656 = vmul.f32 %v70, %v652
  %v657 = vmul.f32 %v75, %v652
  %v658 = vmul.f32 %v80, %v652
  %v659 = vmul.f32 %v85, %v652
  %v660 = vmul.f32 %v90, %v652
  %v661 = vmul.f32 %v95, %v652
  %v662 = vmul.f32 %v100, %v652
  %v663 = vmul.f32 %v105, %v652
  %v664 = vmul.f32 %v110, %v652
  %v665 = vmul.f32 %v115, %v652
  %v666 = vmul.f32 %v120, %v652
  %v667 = vmul.f32 %v125, %v652
  %v668 = vmul.f32 %v130, %v652
  %v669 = vlaneseq
  %v670 = vshrl.u32 %v669, 7
  %v671 = vsub.s32 1, %v670
  %v672 = vrot.slane %v648, %v671
  %v673 = vmul.f32 %v150, %v672
  %v674 = vmul.f32 %v154, %v672
  %v675 = vmul.f32 %v158, %v672
  %v676 = vmul.f32 %v162, %v672
  %v677 = vmul.f32 %v166, %v672
  %v678 = vmul.f32 %v170, %v672
  %v679 = vmul.f32 %v174, %v672
  %v680 = vmul.f32 %v178, %v672
  %v681 = vmul.f32 %v182, %v672
  %v682 = vmul.f32 %v186, %v672
  %v683 = vmul.f32 %v190, %v672
  %v684 = vmul.f32 %v194, %v672
  %v685 = vmul.f32 %v198, %v672
  %v686 = vmul.f32 %v202, %v672
  %v687 = vmul.f32 %v206, %v672
  %v688 = vmul.f32 %v210, %v672
  %v689 = vadd.f32 %v653, %v673
  %v690 = vadd.f32 %v654, %v674
  %v691 = vadd.f32 %v655, %v675
  %v692 = vadd.f32 %v656, %v676
  %v693 = vadd.f32 %v657, %v677
  %v694 = vadd.f32 %v658, %v678
  %v695 = vadd.f32 %v659, %v679
  %v696 = vadd.f32 %v660, %v680
  %v697 = vadd.f32 %v661, %v681
  %v698 = vadd.f32 %v662, %v682
  %v699 = vadd.f32 %v663, %v683
  %v700 = vadd.f32 %v664, %v684
  %v701 = vadd.f32 %v665, %v685
  %v702 = vadd.f32 %v666, %v686
  %v703 = vadd.f32 %v667, %v687
  %v704 = vadd.f32 %v668, %v688
  %v705 = vlaneseq
  %v706 = vshrl.u32 %v705, 7
  %v707 = vsub.s32 2, %v706
  %v708 = vrot.slane %v648, %v707
  %v709 = vmul.f32 %v230, %v708
  %v710 = vmul.f32 %v234, %v708
  %v711 = vmul.f32 %v238, %v708
  %v712 = vmul.f32 %v242, %v708
  %v713 = vmul.f32 %v246, %v708
  %v714 = vmul.f32 %v250, %v708
  %v715 = vmul.f32 %v254, %v708
  %v716 = vmul.f32 %v258, %v708
  %v717 = vmul.f32 %v262, %v708
  %v718 = vmul.f32 %v266, %v708
  %v719 = vmul.f32 %v270, %v708
  %v720 = vmul.f32 %v274, %v708
  %v721 = vmul.f32 %v278, %v708
  %v722 = vmul.f32 %v282, %v708
  %v723 = vmul.f32 %v286, %v708
  %v724 = vmul.f32 %v290, %v708
  %v725 = vadd.f32 %v689, %v709
  %v726 = vadd.f32 %v690, %v710
  %v727 = vadd.f32 %v691, %v711
  %v728 = vadd.f32 %v692, %v712
  %v729 = vadd.f32 %v693, %v713
  %v730 = vadd.f32 %v694, %v714
  %v731 = vadd.f32 %v695, %v715
  %v732 = vadd.f32 %v696, %v716
  %v733 = vadd.f32 %v697, %v717
  %v734 = vadd.f32 %v698, %v718
  %v735 = vadd.f32 %v699, %v719
  %v736 = vadd.f32 %v700, %v720
  %v737 = vadd.f32 %v701, %v721
  %v738 = vadd.f32 %v702, %v722
  %v739 = vadd.f32 %v703, %v723
  %v740 = vadd.f32 %v704, %v724
  %v741 = vpack.c.bf16 %v589, %v586
  %v742 = vpack.c.bf16 %v597, %v594
  %v743 = vpack.c.bf16 %v605, %v602
  %v744 = vpack.c.bf16 %v613, %v610
  %v745 = vpack.c.bf16 %v621, %v618
  %v746 = vpack.c.bf16 %v629, %v626
  %v747 = vpack.c.bf16 %v637, %v634
  %v748 = vpack.c.bf16 %v645, %v642
  %v757 = vunpack.c.l.b16 %v741
  %v758 = vunpack.c.h.b16 %v741
  %v759 = vunpack.c.l.b16 %v742
  %v760 = vunpack.c.h.b16 %v742
  %v761 = vunpack.c.l.b16 %v743
  %v762 = vunpack.c.h.b16 %v743
  %v763 = vunpack.c.l.b16 %v744
  %v764 = vunpack.c.h.b16 %v744
  %v765 = vunpack.c.l.b16 %v745
  %v766 = vunpack.c.h.b16 %v745
  %v767 = vunpack.c.l.b16 %v746
  %v768 = vunpack.c.h.b16 %v746
  %v769 = vunpack.c.l.b16 %v747
  %v770 = vunpack.c.h.b16 %v747
  %v771 = vunpack.c.l.b16 %v748
  %v772 = vunpack.c.h.b16 %v748
  %v773 = vpack.c.b16 %v757, %v757
  %v774 = vpack.c.b16 %v758, %v758
  %v775 = vpack.c.b16 %v759, %v759
  %v776 = vpack.c.b16 %v760, %v760
  %v777 = vpack.c.b16 %v761, %v761
  %v778 = vpack.c.b16 %v762, %v762
  %v779 = vpack.c.b16 %v763, %v763
  %v780 = vpack.c.b16 %v764, %v764
  %v781 = vpack.c.b16 %v765, %v765
  %v782 = vpack.c.b16 %v766, %v766
  %v783 = vpack.c.b16 %v767, %v767
  %v784 = vpack.c.b16 %v768, %v768
  %v785 = vpack.c.b16 %v769, %v769
  %v786 = vpack.c.b16 %v770, %v770
  %v787 = vpack.c.b16 %v771, %v771
  %v788 = vpack.c.b16 %v772, %v772
  %vm805 = vcmask 519168
  %806 = vst.msk [vmem:[%s4] sm:$0xf] %vm805, %v773
  %807 = vst.msk [vmem:[%s4 + $0x4] sm:$0xf] %vm805, %v774
  %808 = vst.msk [vmem:[%s4 + $0x8] sm:$0xf] %vm805, %v775
  %809 = vst.msk [vmem:[%s4 + $0xc] sm:$0xf] %vm805, %v776
  %810 = vst.msk [vmem:[%s4 + $0x10] sm:$0xf] %vm805, %v777
  %811 = vst.msk [vmem:[%s4 + $0x14] sm:$0xf] %vm805, %v778
  %812 = vst.msk [vmem:[%s4 + $0x18] sm:$0xf] %vm805, %v779
  %813 = vst.msk [vmem:[%s4 + $0x1c] sm:$0xf] %vm805, %v780
  %814 = vst.msk [vmem:[%s4 + $0x20] sm:$0xf] %vm805, %v781
  %815 = vst.msk [vmem:[%s4 + $0x24] sm:$0xf] %vm805, %v782
  %816 = vst.msk [vmem:[%s4 + $0x28] sm:$0xf] %vm805, %v783
  %817 = vst.msk [vmem:[%s4 + $0x2c] sm:$0xf] %vm805, %v784
  %818 = vst.msk [vmem:[%s4 + $0x30] sm:$0xf] %vm805, %v785
  %819 = vst.msk [vmem:[%s4 + $0x34] sm:$0xf] %vm805, %v786
  %820 = vst.msk [vmem:[%s4 + $0x38] sm:$0xf] %vm805, %v787
  %821 = vst.msk [vmem:[%s4 + $0x3c] sm:$0xf] %vm805, %v788
  %838 = vrot.lane.b32.xlu0 %v586, 64
  %v839 = vpop.permute.xlu0 %838
  %840 = vrot.lane.b32.xlu0 %v589, 64
  %v841 = vpop.permute.xlu0 %840
  %842 = vrot.lane.b32.xlu0 %v594, 64
  %v843 = vpop.permute.xlu0 %842
  %844 = vrot.lane.b32.xlu0 %v597, 64
  %v845 = vpop.permute.xlu0 %844
  %846 = vrot.lane.b32.xlu0 %v602, 64
  %v847 = vpop.permute.xlu0 %846
  %848 = vrot.lane.b32.xlu0 %v605, 64
  %v849 = vpop.permute.xlu0 %848
  %850 = vrot.lane.b32.xlu0 %v610, 64
  %v851 = vpop.permute.xlu0 %850
  %852 = vrot.lane.b32.xlu0 %v613, 64
  %v853 = vpop.permute.xlu0 %852
  %854 = vrot.lane.b32.xlu0 %v618, 64
  %v855 = vpop.permute.xlu0 %854
  %856 = vrot.lane.b32.xlu0 %v621, 64
  %v857 = vpop.permute.xlu0 %856
  %858 = vrot.lane.b32.xlu0 %v626, 64
  %v859 = vpop.permute.xlu0 %858
  %860 = vrot.lane.b32.xlu0 %v629, 64
  %v861 = vpop.permute.xlu0 %860
  %862 = vrot.lane.b32.xlu0 %v634, 64
  %v863 = vpop.permute.xlu0 %862
  %864 = vrot.lane.b32.xlu0 %v637, 64
  %v865 = vpop.permute.xlu0 %864
  %866 = vrot.lane.b32.xlu0 %v642, 64
  %v867 = vpop.permute.xlu0 %866
  %868 = vrot.lane.b32.xlu0 %v645, 64
  %v869 = vpop.permute.xlu0 %868
  %902 = vrot.lane.b32.xlu0 %v725, 32
  %v903 = vpop.permute.xlu0 %902
  %904 = vrot.lane.b32.xlu0 %v726, 32
  %v905 = vpop.permute.xlu0 %904
  %906 = vrot.lane.b32.xlu0 %v727, 32
  %v907 = vpop.permute.xlu0 %906
  %908 = vrot.lane.b32.xlu0 %v728, 32
  %v909 = vpop.permute.xlu0 %908
  %910 = vrot.lane.b32.xlu0 %v729, 32
  %v911 = vpop.permute.xlu0 %910
  %912 = vrot.lane.b32.xlu0 %v730, 32
  %v913 = vpop.permute.xlu0 %912
  %914 = vrot.lane.b32.xlu0 %v731, 32
  %v915 = vpop.permute.xlu0 %914
  %916 = vrot.lane.b32.xlu0 %v732, 32
  %v917 = vpop.permute.xlu0 %916
  %918 = vrot.lane.b32.xlu0 %v733, 32
  %v919 = vpop.permute.xlu0 %918
  %920 = vrot.lane.b32.xlu0 %v734, 32
  %v921 = vpop.permute.xlu0 %920
  %922 = vrot.lane.b32.xlu0 %v735, 32
  %v923 = vpop.permute.xlu0 %922
  %924 = vrot.lane.b32.xlu0 %v736, 32
  %v925 = vpop.permute.xlu0 %924
  %926 = vrot.lane.b32.xlu0 %v737, 32
  %v927 = vpop.permute.xlu0 %926
  %928 = vrot.lane.b32.xlu0 %v738, 32
  %v929 = vpop.permute.xlu0 %928
  %930 = vrot.lane.b32.xlu0 %v739, 32
  %v931 = vpop.permute.xlu0 %930
  %932 = vrot.lane.b32.xlu0 %v740, 32
  %v933 = vpop.permute.xlu0 %932
  %v950 = vsel %vm436, %v839, %v903
  %v951 = vsel %vm436, %v841, %v905
  %v952 = vsel %vm436, %v843, %v907
  %v953 = vsel %vm436, %v845, %v909
  %v954 = vsel %vm436, %v847, %v911
  %v955 = vsel %vm436, %v849, %v913
  %v956 = vsel %vm436, %v851, %v915
  %v957 = vsel %vm436, %v853, %v917
  %v958 = vsel %vm436, %v855, %v919
  %v959 = vsel %vm436, %v857, %v921
  %v960 = vsel %vm436, %v859, %v923
  %v961 = vsel %vm436, %v861, %v925
  %v962 = vsel %vm436, %v863, %v927
  %v963 = vsel %vm436, %v865, %v929
  %v964 = vsel %vm436, %v867, %v931
  %v965 = vsel %vm436, %v869, %v933
  %966 = vst.msk [vmem:[%s5] sm:$0xff] %vm453, %v950
  %967 = vst.msk [vmem:[%s5 + $0x8] sm:$0xff] %vm453, %v951
  %968 = vst.msk [vmem:[%s5 + $0x10] sm:$0xff] %vm453, %v952
  %969 = vst.msk [vmem:[%s5 + $0x18] sm:$0xff] %vm453, %v953
  %970 = vst.msk [vmem:[%s5 + $0x20] sm:$0xff] %vm453, %v954
  %971 = vst.msk [vmem:[%s5 + $0x28] sm:$0xff] %vm453, %v955
  %972 = vst.msk [vmem:[%s5 + $0x30] sm:$0xff] %vm453, %v956
  %973 = vst.msk [vmem:[%s5 + $0x38] sm:$0xff] %vm453, %v957
  %974 = vst.msk [vmem:[%s5 + $0x40] sm:$0xff] %vm453, %v958
  %975 = vst.msk [vmem:[%s5 + $0x48] sm:$0xff] %vm453, %v959
  %976 = vst.msk [vmem:[%s5 + $0x50] sm:$0xff] %vm453, %v960
  %977 = vst.msk [vmem:[%s5 + $0x58] sm:$0xff] %vm453, %v961
  %978 = vst.msk [vmem:[%s5 + $0x60] sm:$0xff] %vm453, %v962
  %979 = vst.msk [vmem:[%s5 + $0x68] sm:$0xff] %vm453, %v963
  %980 = vst.msk [vmem:[%s5 + $0x70] sm:$0xff] %vm453, %v964
  %981 = vst.msk [vmem:[%s5 + $0x78] sm:$0xff] %vm453, %v965
  // Predicated region
  $region18: #{tpu_custom_call.1} parent=0 // pred_check
    _
  $region19: #{tpu_custom_call.1} parent=0 // pred_check_branch
    %983 = sbr.rel (0) target = $region21
  $region20: #{tpu_custom_call.1} parent=0 // pred_region
    _
  $region21: #{tpu_custom_call.1} parent=0 // pred_fallthru
    _
  // Predicated region
  $region22: #{tpu_custom_call.1} parent=0 // pred_check
    _
  $region23: #{tpu_custom_call.1} parent=0 // pred_check_branch
    %985 = sbr.rel (0) target = $region25
  $region24: #{tpu_custom_call.1} parent=0 // pred_region
    _
  $region25: #{tpu_custom_call.1} parent=0 // pred_fallthru
    _
  // Predicated region
  $region26: #{tpu_custom_call.1} parent=0 // pred_check
    _
  $region27: #{tpu_custom_call.1} parent=0 // pred_check_branch
    %987 = sbr.rel (0) target = $region29
  $region28: #{tpu_custom_call.1} parent=0 // pred_region
    _
  $region29: #{tpu_custom_call.1} parent=0 // pred_fallthru
    _
  // Predicated region
  $region30: #{tpu_custom_call.1} parent=0 // pred_check
    _
  $region31: #{tpu_custom_call.1} parent=0 // pred_check_branch
    %989 = sbr.rel (0) target = $region33
  $region32: #{tpu_custom_call.1} parent=0 // pred_region
    _
  $region33: #{tpu_custom_call.1} parent=0 // pred_fallthru
    _

</llo_original>
